<compile_context>
chip_gen: v7x
topology: tpu7x:2x2x1
jax: 0.10.0
libtpu: 0.0.40
codegen_flags: <defaults>
</compile_context>

<pallas_src>
import jax
import jax.numpy as jnp
from jax.experimental import pallas as pl
from jax.experimental.pallas import tpu as pltpu


def _round_up(v: int, m: int) -> int:
    return (v + m - 1) // m * m


def leconv_kernel(xe_ref, adj_ref, xt_ref, wa_ref, w23_ref, b3_ref, out_ref):
    """One destination-row tile of LEConv.

    xe_ref : [N_src, F+1] bf16  all source-node features with a ones column
    adj_ref: [tm, N_src]  bf16  dense weighted adjacency rows (dst tile, src)
    xt_ref : [tm, F]      f32   destination-node features
    wa_ref : [F+1, Cp]    f32   [W1 ; b1], columns zero-padded to Cp
    w23_ref: [F, 2*Cp]    f32   [-W2 | W3], each zero-padded to Cp
    b3_ref : [1, Cp]      f32
    out_ref: [tm, Cp]     f32
    """
    f_in = xt_ref.shape[-1]
    c_pad = out_ref.shape[-1]

    # (1) Single bf16 MXU pass over the adjacency tile.  The ones column of
    #     xe folds the weighted in-degree (A @ 1) into the same matmul, so no
    #     XLU lane reduction over the [tm, N] block is needed.
    agg = jnp.dot(adj_ref[...], xe_ref[...],
                  preferred_element_type=jnp.float32)           # [tm, F+1]
    deg = agg[:, f_in:f_in + 1]                                 # [tm, 1] = A@1

    # (2) (A@x) @ W1 + deg * b1 in one matmul: b1 is an extra weight row that
    #     multiplies the degree column of `agg`.
    out = jnp.dot(agg, wa_ref[...], preferred_element_type=jnp.float32)

    # (3) Remaining node-wise linears fused into one lane-dense matmul
    #     (output width 2*Cp): h = x_i @ [-W2 | W3].
    h = jnp.dot(xt_ref[...], w23_ref[...], preferred_element_type=jnp.float32)

    # (4) VPU combine: out = A@a - deg*(x@W2) + x@W3 + b3.
    out_ref[...] = out + deg * h[:, :c_pad] + h[:, c_pad:] + b3_ref[...]


def gnn_encoder_forward(x, edge_index, edge_weight, params, *, row_tile=512):
    """x: [N, F_in] f32, edge_index: [2, E] i32 (row0=src j, row1=dst i),
    edge_weight: [E] f32. Returns [N, hidden] f32."""
    N, F_in = x.shape
    C_out = params["w1"].shape[1]
    C_pad = _round_up(C_out, 128)               # lane-dense (unmasked) stores

    # Glue: scatter sparse edges into a dense adjacency (dst, src).
    # TODO(synk): for large graphs replace the dense O(N^2) adjacency with a
    # sparse edge-list formulation via PrefetchScalarGridSpec (scalar-prefetch
    # src/dst/weight) and per-dst-tile gather/accumulate inside the kernel.
    src, dst = edge_index[0], edge_index[1]
    adj = jnp.zeros((N, N), dtype=jnp.float32).at[dst, src].add(edge_weight)

    # Destination-row tiling.
    tm = min(row_tile, _round_up(N, 8))
    N_pad = _round_up(N, tm)
    n_tiles = N_pad // tm

    # bf16 adjacency (the O(N^2) buffer) + bf16 [x | 1]; f32 accumulation in
    # the kernel via preferred_element_type.
    adj_p = jnp.pad(adj, ((0, N_pad - N), (0, 0))).astype(jnp.bfloat16)
    x_p = jnp.pad(x, ((0, N_pad - N), (0, 0)))                      # f32 dst feats
    xe = jnp.concatenate([x, jnp.ones((N, 1), x.dtype)], axis=1)
    xe = xe.astype(jnp.bfloat16)                                    # [N, F+1]

    # Fused / padded weights (built once outside the kernel).
    wa = jnp.concatenate([params["w1"], params["b1"][None, :]], axis=0)   # [F+1, C]
    wa = jnp.zeros((F_in + 1, C_pad), jnp.float32).at[:, :C_out].set(wa)
    w2p = jnp.zeros((F_in, C_pad), jnp.float32).at[:, :C_out].set(-params["w2"])
    w3p = jnp.zeros((F_in, C_pad), jnp.float32).at[:, :C_out].set(params["w3"])
    w23 = jnp.concatenate([w2p, w3p], axis=1)                              # [F, 2*Cp]
    b3p = jnp.zeros((1, C_pad), jnp.float32).at[:, :C_out].set(params["b3"][None, :])

    out = pl.pallas_call(
        leconv_kernel,
        out_shape=jax.ShapeDtypeStruct((N_pad, C_pad), jnp.float32),
        grid=(n_tiles,),
        in_specs=[
            pl.BlockSpec((N, F_in + 1), lambda i: (0, 0)),        # xe (all src)
            pl.BlockSpec((tm, N), lambda i: (i, 0)),              # adj row tile
            pl.BlockSpec((tm, F_in), lambda i: (i, 0)),           # x dst tile
            pl.BlockSpec((F_in + 1, C_pad), lambda i: (0, 0)),    # [W1; b1]
            pl.BlockSpec((F_in, 2 * C_pad), lambda i: (0, 0)),    # [-W2 | W3]
            pl.BlockSpec((1, C_pad), lambda i: (0, 0)),           # b3
        ],
        out_specs=pl.BlockSpec((tm, C_pad), lambda i: (i, 0)),
        compiler_params=pltpu.CompilerParams(
            dimension_semantics=("parallel",),        # dst tiles -> both TCs on v7x
            vmem_limit_bytes=32 * 1024 * 1024,        # safe on v7x 64 MiB too
        ),
    )(xe, adj_p, x_p, wa, w23, b3p)

    return out[:N, :C_out]


def init_params(key, f_in, hidden):
    k1, k2, k3, k4, k5 = jax.random.split(key, 5)
    scale = 1.0 / jnp.sqrt(f_in)
    return {
        # weights stored pre-transposed: [F_in, hidden]
        "w1": jax.random.uniform(k1, (f_in, hidden), jnp.float32, -scale, scale),
        "b1": jax.random.uniform(k2, (hidden,), jnp.float32, -scale, scale),
        "w2": jax.random.uniform(k3, (f_in, hidden), jnp.float32, -scale, scale),
        "w3": jax.random.uniform(k4, (f_in, hidden), jnp.float32, -scale, scale),
        "b3": jax.random.uniform(k5, (hidden,), jnp.float32, -scale, scale),
    }


def _reference(x, edge_index, edge_weight, params):
    # Pure-JAX, edge-based LEConv reference (independent of the dense path).
    a = x @ params["w1"] + params["b1"]
    b = x @ params["w2"]
    c = x @ params["w3"] + params["b3"]
    src, dst = edge_index[0], edge_index[1]
    msg = edge_weight[:, None] * (a[src] - b[dst])
    agg = jnp.zeros_like(c).at[dst].add(msg)
    return agg + c


if __name__ == "__main__":
    key = jax.random.PRNGKey(0)
    N, F_in, hidden, E = 64, 16, 32, 128

    kx, ke, kw, kp = jax.random.split(key, 4)
    x = jax.random.normal(kx, (N, F_in), jnp.float32)
    edge_index = jax.random.randint(ke, (2, E), 0, N, dtype=jnp.int32)
    edge_weight = jax.random.uniform(kw, (E,), jnp.float32)
    params = init_params(kp, F_in, hidden)

    out = gnn_encoder_forward(x, edge_index, edge_weight, params)
    out = jax.block_until_ready(out)

    ref = _reference(x, edge_index, edge_weight, params)
    assert out.shape == (N, hidden)
    # bf16 adjacency/features on the aggregation matmul -> slightly looser
    # tolerance than the previous all-f32 version (f32 accumulation kept).
    assert jnp.allclose(out, ref, atol=5e-2, rtol=5e-2), float(
        jnp.max(jnp.abs(out - ref)))

    print("KERNEL_OK")
</pallas_src>

<mosaic_0001>
module attributes {stable_mosaic.version = 11 : i64} {
  func.func @leconv_kernel(%arg0: i32, %arg1: memref<64x17xbf16, #tpu.memory_space<vmem>>, %arg2: memref<64x64xbf16, #tpu.memory_space<vmem>>, %arg3: memref<64x16xf32, #tpu.memory_space<vmem>>, %arg4: memref<17x128xf32, #tpu.memory_space<vmem>>, %arg5: memref<16x256xf32, #tpu.memory_space<vmem>>, %arg6: memref<1x128xf32, #tpu.memory_space<vmem>>, %arg7: memref<64x128xf32, #tpu.memory_space<vmem>>) attributes {dimension_semantics = [#tpu.dimension_semantics<parallel>], iteration_bounds = array<i64: 1>, scalar_prefetch = 0 : i64, scratch_operands = 0 : i64, tpu.core_type = #tpu.core_type<tc>, window_params = [{pipeline_mode = #tpu.pipeline_mode<synchronous>, transform_indices = @transform_0, window_bounds = array<i64: 64, 17>}, {transform_indices = @transform_1, window_bounds = array<i64: 64, 64>}, {transform_indices = @transform_2, window_bounds = array<i64: 64, 16>}, {pipeline_mode = #tpu.pipeline_mode<synchronous>, transform_indices = @transform_3, window_bounds = array<i64: 17, 128>}, {pipeline_mode = #tpu.pipeline_mode<synchronous>, transform_indices = @transform_4, window_bounds = array<i64: 16, 256>}, {pipeline_mode = #tpu.pipeline_mode<synchronous>, transform_indices = @transform_5, window_bounds = array<i64: 1, 128>}, {transform_indices = @transform_6, window_bounds = array<i64: 64, 128>}]} {
    %c0 = arith.constant 0 : index
    %c0_0 = arith.constant 0 : index
    %0 = vector.load %arg2[%c0, %c0_0] : memref<64x64xbf16, #tpu.memory_space<vmem>>, vector<64x64xbf16>
    %c0_1 = arith.constant 0 : index
    %c0_2 = arith.constant 0 : index
    %1 = vector.load %arg1[%c0_1, %c0_2] : memref<64x17xbf16, #tpu.memory_space<vmem>>, vector<64x17xbf16>
    %cst = arith.constant dense<0.000000e+00> : vector<64x17xf32>
    %2 = tpu.matmul %0, %1, %cst {dimension_numbers = #tpu.dot_dimension_numbers<[1], [0], [0], [1], [0, 0, 1, 1], [], []>} : vector<64x64xbf16>, vector<64x17xbf16>, vector<64x17xf32> -> vector<64x17xf32>
    %3 = vector.extract_strided_slice %2 {offsets = [0, 16], sizes = [64, 1], strides = [1, 1]} : vector<64x17xf32> to vector<64x1xf32>
    %c0_3 = arith.constant 0 : index
    %c0_4 = arith.constant 0 : index
    %4 = vector.load %arg4[%c0_3, %c0_4] : memref<17x128xf32, #tpu.memory_space<vmem>>, vector<17x128xf32>
    %cst_5 = arith.constant dense<0.000000e+00> : vector<64x128xf32>
    %5 = tpu.matmul %2, %4, %cst_5 {dimension_numbers = #tpu.dot_dimension_numbers<[1], [0], [0], [1], [0, 0, 1, 1], [], []>} : vector<64x17xf32>, vector<17x128xf32>, vector<64x128xf32> -> vector<64x128xf32>
    %c0_6 = arith.constant 0 : index
    %c0_7 = arith.constant 0 : index
    %6 = vector.load %arg3[%c0_6, %c0_7] : memref<64x16xf32, #tpu.memory_space<vmem>>, vector<64x16xf32>
    %c0_8 = arith.constant 0 : index
    %c0_9 = arith.constant 0 : index
    %7 = vector.load %arg5[%c0_8, %c0_9] : memref<16x256xf32, #tpu.memory_space<vmem>>, vector<16x256xf32>
    %cst_10 = arith.constant dense<0.000000e+00> : vector<64x256xf32>
    %8 = tpu.matmul %6, %7, %cst_10 {dimension_numbers = #tpu.dot_dimension_numbers<[1], [0], [0], [1], [0, 0, 1, 1], [], []>} : vector<64x16xf32>, vector<16x256xf32>, vector<64x256xf32> -> vector<64x256xf32>
    %9 = vector.extract_strided_slice %8 {offsets = [0, 0], sizes = [64, 128], strides = [1, 1]} : vector<64x256xf32> to vector<64x128xf32>
    %10 = vector.broadcast %3 : vector<64x1xf32> to vector<64x128xf32>
    %11 = arith.mulf %10, %9 : vector<64x128xf32>
    %12 = arith.addf %5, %11 : vector<64x128xf32>
    %13 = vector.extract_strided_slice %8 {offsets = [0, 128], sizes = [64, 128], strides = [1, 1]} : vector<64x256xf32> to vector<64x128xf32>
    %14 = arith.addf %12, %13 : vector<64x128xf32>
    %c0_11 = arith.constant 0 : index
    %c0_12 = arith.constant 0 : index
    %15 = vector.load %arg6[%c0_11, %c0_12] : memref<1x128xf32, #tpu.memory_space<vmem>>, vector<1x128xf32>
    %16 = vector.broadcast %15 : vector<1x128xf32> to vector<64x128xf32>
    %17 = arith.addf %14, %16 : vector<64x128xf32>
    %c0_13 = arith.constant 0 : index
    %c0_14 = arith.constant 0 : index
    %18 = vector.load %arg7[%c0_13, %c0_14] : memref<64x128xf32, #tpu.memory_space<vmem>>, vector<64x128xf32>
    tpu.vector_store %arg7[%c0_13, %c0_14], %17 {strides = array<i32>} : memref<64x128xf32, #tpu.memory_space<vmem>>, vector<64x128xf32>,
    return
  }
  func.func @transform_0(%arg0: i32) -> (i32, i32) {
    %c0_i32 = arith.constant 0 : i32
    %c0_i32_0 = arith.constant 0 : i32
    %c0_i32_1 = arith.constant 0 : i32
    return %c0_i32, %c0_i32_0 : i32, i32
  }
  func.func @transform_1(%arg0: i32) -> (i32, i32) {
    %c0_i32 = arith.constant 0 : i32
    %c0_i32_0 = arith.constant 0 : i32
    return %arg0, %c0_i32 : i32, i32
  }
  func.func @transform_2(%arg0: i32) -> (i32, i32) {
    %c0_i32 = arith.constant 0 : i32
    %c0_i32_0 = arith.constant 0 : i32
    return %arg0, %c0_i32 : i32, i32
  }
  func.func @transform_3(%arg0: i32) -> (i32, i32) {
    %c0_i32 = arith.constant 0 : i32
    %c0_i32_0 = arith.constant 0 : i32
    %c0_i32_1 = arith.constant 0 : i32
    return %c0_i32, %c0_i32_0 : i32, i32
  }
  func.func @transform_4(%arg0: i32) -> (i32, i32) {
    %c0_i32 = arith.constant 0 : i32
    %c0_i32_0 = arith.constant 0 : i32
    %c0_i32_1 = arith.constant 0 : i32
    return %c0_i32, %c0_i32_0 : i32, i32
  }
  func.func @transform_5(%arg0: i32) -> (i32, i32) {
    %c0_i32 = arith.constant 0 : i32
    %c0_i32_0 = arith.constant 0 : i32
    %c0_i32_1 = arith.constant 0 : i32
    return %c0_i32, %c0_i32_0 : i32, i32
  }
  func.func @transform_6(%arg0: i32) -> (i32, i32) {
    %c0_i32 = arith.constant 0 : i32
    %c0_i32_0 = arith.constant 0 : i32
    return %arg0, %c0_i32 : i32, i32
  }
}

</mosaic_0001>

<llo_original>
// kernel: tpu_custom_call.1
$region0: #{tpu_custom_call.1}
  #allocation0 [shape = 'u32[]', space=smem, size = 0x4, offset = 0x4, fixed_abs, tag = 'smem constant byte address 0x4 - core index']
  #allocation1 [shape = 'u32[144,128]{1,0:T(1,128)}', space=vmem, size = 0x12000, scoped, tag = 'internal scratch']
  %s0 = inlined_call_operand.vmem [shape: bf16[64,17], index: 0, kind: input, shape index: {}]
  %s1 = inlined_call_operand.vmem [shape: bf16[64,64], index: 1, kind: input, shape index: {}]
  %s2 = inlined_call_operand.vmem [shape: f32[64,16], index: 2, kind: input, shape index: {}]
  %s3 = inlined_call_operand.vmem [shape: f32[17,128], index: 3, kind: input, shape index: {}]
  %s4 = inlined_call_operand.vmem [shape: f32[16,256], index: 4, kind: input, shape index: {}]
  %s5 = inlined_call_operand.vmem [shape: f32[1,128], index: 5, kind: input, shape index: {}]
  %s6 = inlined_call_operand.hbm [shape: f32[64,128], index: 6, kind: output, shape index: {}]
  %s7 = sld [smem:[#allocation0]]
  $region34: #{tpu_custom_call.1} parent=0
    _
  %s9 = ssub.s32 1, %s7
  %s10 = scalar_select 0, %s9, %s7
  $region1: #{tpu_custom_call.1} parent=0
    #allocation2 [shape = 'u8[32768]{0}', space=vmem, size = 0x8000, scoped, tag = 'output window, operand 0, single buffered']
    #allocation3 [shape = 's32[1]{0}', space=sflag, size = 0x4, scoped, tag = 'scoped memory for tpu_custom_call.1']
    %11 = vsyncpa [#allocation3], 0
    // Predicated region
    $region2: #{tpu_custom_call.1} parent=1 // pred_check
      _
    $region3: #{tpu_custom_call.1} parent=1 // pred_check_branch
      %13 = sbr.rel (0) target = $region5
    $region4: #{tpu_custom_call.1} parent=1 // pred_region
      _
    $region5: #{tpu_custom_call.1} parent=1 // pred_fallthru
      _
    // Predicated region
    $region6: #{tpu_custom_call.1} parent=1 // pred_check
      _
    $region7: #{tpu_custom_call.1} parent=1 // pred_check_branch
      %15 = sbr.rel (0) target = $region9
    $region8: #{tpu_custom_call.1} parent=1 // pred_region
      _
    $region9: #{tpu_custom_call.1} parent=1 // pred_fallthru
      _
    // Predicated region
    $region10: #{tpu_custom_call.1} parent=1 // pred_check
      _
    $region11: #{tpu_custom_call.1} parent=1 // pred_check_branch
      %17 = sbr.rel (0) target = $region13
    $region12: #{tpu_custom_call.1} parent=1 // pred_region
      _
    $region13: #{tpu_custom_call.1} parent=1 // pred_fallthru
      _
    // Predicated region
    $region14: #{tpu_custom_call.1} parent=1 // pred_check
      _
    $region15: #{tpu_custom_call.1} parent=1 // pred_check_branch
      %19 = sbr.rel (0) target = $region17
    $region16: #{tpu_custom_call.1} parent=1 // pred_region
      _
    $region17: #{tpu_custom_call.1} parent=1 // pred_fallthru
      _
    // Predicated region
    $region18: #{tpu_custom_call.1} parent=1 // pred_check
      _
    $region19: #{tpu_custom_call.1} parent=1 // pred_check_branch
      %21 = sbr.rel (0) target = $region21
    $region20: #{tpu_custom_call.1} parent=1 // pred_region
      _
    $region21: #{tpu_custom_call.1} parent=1 // pred_fallthru
      _
    // Predicated region
    $region22: #{tpu_custom_call.1} parent=1 // pred_check
      _
    $region23: #{tpu_custom_call.1} parent=1 // pred_check_branch
      %23 = sbr.rel (0) target = $region25
    $region24: #{tpu_custom_call.1} parent=1 // pred_region
      _
    $region25: #{tpu_custom_call.1} parent=1 // pred_fallthru
      _
    %v25 = vld [vmem:[%s1] sm:$0xf]
    %v26 = vld [vmem:[%s1 + $0x4] sm:$0xf]
    %v27 = vld [vmem:[%s1 + $0x8] sm:$0xf]
    %v28 = vld [vmem:[%s1 + $0xc] sm:$0xf]
    %v29 = vld [vmem:[%s1 + $0x10] sm:$0xf]
    %v30 = vld [vmem:[%s1 + $0x14] sm:$0xf]
    %v31 = vld [vmem:[%s1 + $0x18] sm:$0xf]
    %v32 = vld [vmem:[%s1 + $0x1c] sm:$0xf]
    %v33 = vld [vmem:[%s0] sm:$0xf]
    %v34 = vld [vmem:[%s0 + $0x4] sm:$0xf]
    %v35 = vld [vmem:[%s0 + $0x8] sm:$0xf]
    %v36 = vld [vmem:[%s0 + $0xc] sm:$0xf]
    %v37 = vld [vmem:[%s0 + $0x10] sm:$0xf]
    %v38 = vld [vmem:[%s0 + $0x14] sm:$0xf]
    %v39 = vld [vmem:[%s0 + $0x18] sm:$0xf]
    %v40 = vld [vmem:[%s0 + $0x1c] sm:$0xf]
    %v49 = vunpack.c.l.b16 %v25
    %v50 = vunpack.c.l.b16 %v26
    %v51 = vunpack.c.l.b16 %v27
    %v52 = vunpack.c.l.b16 %v28
    %v53 = vunpack.c.l.b16 %v29
    %v54 = vunpack.c.l.b16 %v30
    %v55 = vunpack.c.l.b16 %v31
    %v56 = vunpack.c.l.b16 %v32
    %v57 = vpack.c.b16 %v50, %v49
    %v58 = vpack.c.b16 %v52, %v51
    %v59 = vpack.c.b16 %v54, %v53
    %v60 = vpack.c.b16 %v56, %v55
    %v69 = vunpack.c.l.b16 %v33
    %v70 = vunpack.c.l.b16 %v34
    %v71 = vunpack.c.l.b16 %v35
    %v72 = vunpack.c.l.b16 %v36
    %v73 = vunpack.c.l.b16 %v37
    %v74 = vunpack.c.l.b16 %v38
    %v75 = vunpack.c.l.b16 %v39
    %v76 = vunpack.c.l.b16 %v40
    %v77 = vpack.c.b16 %v70, %v69
    %v78 = vpack.c.b16 %v72, %v71
    %v79 = vpack.c.b16 %v74, %v73
    %v80 = vpack.c.b16 %v76, %v75
    %vm85 = vcmask 523264
    %v87 = vsel %vm85, %v57, 0
    %v90 = vsel %vm85, %v58, 0
    %v93 = vsel %vm85, %v59, 0
    %v96 = vsel %vm85, %v60, 0
    %98 = vmatprep.subr.bf16.mxu0 0
    %99 = vmatpush1.bf16.msra.mxu0 %v77
    %100 = vmatprep.subr.bf16.mxu0 0
    %101 = vmatpush1.bf16.msra.mxu0 %v78
    %102 = vmatprep.subr.bf16.mxu0 0
    %103 = vmatpush1.bf16.msra.mxu0 %v79
    %104 = vmatprep.subr.bf16.mxu0 0
    %105 = vmatpush1.bf16.msra.mxu0 %v80
    %106 = vmatprep.subr.bf16.mxu0 0
    %107 = vmatpush1.bf16.msra.mxu0 0
    %108 = vmatprep.subr.bf16.mxu0 0
    %109 = vmatpush1.bf16.msra.mxu0 0
    %110 = vmatprep.subr.bf16.mxu0 0
    %111 = vmatpush1.bf16.msra.mxu0 0
    %112 = vmatprep.subr.bf16.mxu0 0
    %113 = vmatpush1.bf16.msra.mxu0 0
    %114 = vmatprep.subr.bf16.mxu0 0
    %115 = vmatpush1.bf16.msra.mxu0 0
    %116 = vmatprep.subr.bf16.mxu0 0
    %117 = vmatpush1.bf16.msra.mxu0 0
    %118 = vmatprep.subr.bf16.mxu0 0
    %119 = vmatpush1.bf16.msra.mxu0 0
    %120 = vmatprep.subr.bf16.mxu0 0
    %121 = vmatpush1.bf16.msra.mxu0 0
    %122 = vmatprep.subr.bf16.mxu0 0
    %123 = vmatpush1.bf16.msra.mxu0 0
    %124 = vmatprep.subr.bf16.mxu0 0
    %125 = vmatpush1.bf16.msra.mxu0 0
    %126 = vmatprep.subr.bf16.mxu0 0
    %127 = vmatpush1.bf16.msra.mxu0 0
    %128 = vmatprep.subr.bf16.mxu0 0
    %129 = vmatpush1.bf16.msra.mxu0 0
    %130 = vmatprep.mubr.bf16.mxu0 0
    %131 = vmatmul.mubr.bf16.gmra.mrb[0].mxu0 %v87
    %v132 = vpop.f32.mrb[0].mxu0
    %v133 = vadd.f32 0.0, %v132
    %v134 = vpop.f32.mrb[0].mxu0
    %v135 = vpop.f32.mrb[0].mxu0
    %v136 = vadd.f32 0.0, %v135
    %v137 = vpop.f32.mrb[0].mxu0
    %138 = vmatprep.mubr.bf16.mxu0 0
    %139 = vmatmul.mubr.bf16.gmra.mrb[0].mxu0 %v90
    %v140 = vpop.f32.mrb[0].mxu0
    %v141 = vadd.f32 0.0, %v140
    %v142 = vpop.f32.mrb[0].mxu0
    %v143 = vpop.f32.mrb[0].mxu0
    %v144 = vadd.f32 0.0, %v143
    %v145 = vpop.f32.mrb[0].mxu0
    %146 = vmatprep.mubr.bf16.mxu0 0
    %147 = vmatmul.mubr.bf16.gmra.mrb[0].mxu0 %v93
    %v148 = vpop.f32.mrb[0].mxu0
    %v149 = vadd.f32 0.0, %v148
    %v150 = vpop.f32.mrb[0].mxu0
    %v151 = vpop.f32.mrb[0].mxu0
    %v152 = vadd.f32 0.0, %v151
    %v153 = vpop.f32.mrb[0].mxu0
    %154 = vmatprep.mubr.bf16.mxu0 0
    %155 = vmatmul.mubr.bf16.gmra.mrb[0].mxu0 %v96
    %v156 = vpop.f32.mrb[0].mxu0
    %v157 = vadd.f32 0.0, %v156
    %v158 = vpop.f32.mrb[0].mxu0
    %v159 = vpop.f32.mrb[0].mxu0
    %v160 = vadd.f32 0.0, %v159
    %v161 = vpop.f32.mrb[0].mxu0
    %162 = vdwg.mxu0
    %v163 = vld [vmem:[%s3] sm:$0xff]
    %v164 = vld [vmem:[%s3 + $0x8] sm:$0xff]
    %v165 = vld [vmem:[%s3 + $0x10] sm:$0x1]
    %v166 = vld [vmem:[%s2] sm:$0xff]
    %v167 = vld [vmem:[%s2 + $0x8] sm:$0xff]
    %v168 = vld [vmem:[%s2 + $0x10] sm:$0xff]
    %v169 = vld [vmem:[%s2 + $0x18] sm:$0xff]
    %v170 = vld [vmem:[%s2 + $0x20] sm:$0xff]
    %v171 = vld [vmem:[%s2 + $0x28] sm:$0xff]
    %v172 = vld [vmem:[%s2 + $0x30] sm:$0xff]
    %v173 = vld [vmem:[%s2 + $0x38] sm:$0xff]
    %v174 = vld [vmem:[%s4] sm:$0xff]
    %v175 = vld [vmem:[%s4 + $0x8] sm:$0xff]
    %v176 = vld [vmem:[%s4 + $0x10] sm:$0xff]
    %v177 = vld [vmem:[%s4 + $0x18] sm:$0xff]
    %vm178 = vcmask 130048
    %v180 = vsel %vm178, %v166, 0
    %v183 = vsel %vm178, %v167, 0
    %v186 = vsel %vm178, %v168, 0
    %v189 = vsel %vm178, %v169, 0
    %v192 = vsel %vm178, %v170, 0
    %v195 = vsel %vm178, %v171, 0
    %v198 = vsel %vm178, %v172, 0
    %v201 = vsel %vm178, %v173, 0
    %203 = vmatprep.subr.mxu0 %v175
    %204 = vmatpush1.msra.mxu0 %v174
    %205 = vmatprep.subr.mxu0 %v177
    %206 = vmatpush1.msra.mxu0 %v176
    %207 = vmatprep.subr.mxu0 0.0
    %208 = vmatpush1.msra.mxu0 0.0
    %209 = vmatprep.subr.mxu0 0.0
    %210 = vmatpush1.msra.mxu0 0.0
    %211 = vmatprep.subr.mxu0 0.0
    %212 = vmatpush1.msra.mxu0 0.0
    %213 = vmatprep.subr.mxu0 0.0
    %214 = vmatpush1.msra.mxu0 0.0
    %215 = vmatprep.subr.mxu0 0.0
    %216 = vmatpush1.msra.mxu0 0.0
    %217 = vmatprep.subr.mxu0 0.0
    %218 = vmatpush1.msra.mxu0 0.0
    %219 = vmatprep.subr.mxu0 0.0
    %220 = vmatpush1.msra.mxu0 0.0
    %221 = vmatprep.subr.mxu0 0.0
    %222 = vmatpush1.msra.mxu0 0.0
    %223 = vmatprep.subr.mxu0 0.0
    %224 = vmatpush1.msra.mxu0 0.0
    %225 = vmatprep.subr.mxu0 0.0
    %226 = vmatpush1.msra.mxu0 0.0
    %227 = vmatprep.subr.mxu0 0.0
    %228 = vmatpush1.msra.mxu0 0.0
    %229 = vmatprep.subr.mxu0 0.0
    %230 = vmatpush1.msra.mxu0 0.0
    %231 = vmatprep.subr.mxu0 0.0
    %232 = vmatpush1.msra.mxu0 0.0
    %233 = vmatprep.subr.mxu0 0.0
    %234 = vmatpush1.msra.mxu0 0.0
    %235 = vmatprep.subr.mxu0 0.0
    %236 = vmatpush1.msra.mxu0 0.0
    %237 = vmatprep.subr.mxu0 0.0
    %238 = vmatpush1.msra.mxu0 0.0
    %239 = vmatprep.subr.mxu0 0.0
    %240 = vmatpush1.msra.mxu0 0.0
    %241 = vmatprep.subr.mxu0 0.0
    %242 = vmatpush1.msra.mxu0 0.0
    %243 = vmatprep.subr.mxu0 0.0
    %244 = vmatpush1.msra.mxu0 0.0
    %245 = vmatprep.subr.mxu0 0.0
    %246 = vmatpush1.msra.mxu0 0.0
    %247 = vmatprep.subr.mxu0 0.0
    %248 = vmatpush1.msra.mxu0 0.0
    %249 = vmatprep.subr.mxu0 0.0
    %250 = vmatpush1.msra.mxu0 0.0
    %251 = vmatprep.subr.mxu0 0.0
    %252 = vmatpush1.msra.mxu0 0.0
    %253 = vmatprep.subr.mxu0 0.0
    %254 = vmatpush1.msra.mxu0 0.0
    %255 = vmatprep.subr.mxu0 0.0
    %256 = vmatpush1.msra.mxu0 0.0
    %257 = vmatprep.subr.mxu0 0.0
    %258 = vmatpush1.msra.mxu0 0.0
    %259 = vmatprep.subr.mxu0 0.0
    %260 = vmatpush1.msra.mxu0 0.0
    %261 = vmatprep.subr.mxu0 0.0
    %262 = vmatpush1.msra.mxu0 0.0
    %263 = vmatprep.subr.mxu0 0.0
    %264 = vmatpush1.msra.mxu0 0.0
    %265 = vmatprep.subr.mxu0 0.0
    %266 = vmatpush1.msra.mxu0 0.0
    %267 = vmatprep.mubr.f32.mxu0 0.0
    %268 = vmatmul.mubr.f32.gmra.mrb[0].mxu0 %v180
    %v269 = vpop.f32.mrb[0].mxu0
    %v270 = vadd.f32 0.0, %v269
    %v271 = vpop.f32.mrb[0].mxu0
    %v272 = vadd.f32 0.0, %v271
    %273 = vmatprep.mubr.f32.mxu0 0.0
    %274 = vmatmul.mubr.f32.gmra.mrb[0].mxu0 %v183
    %v275 = vpop.f32.mrb[0].mxu0
    %v276 = vadd.f32 0.0, %v275
    %v277 = vpop.f32.mrb[0].mxu0
    %v278 = vadd.f32 0.0, %v277
    %279 = vmatprep.mubr.f32.mxu0 0.0
    %280 = vmatmul.mubr.f32.gmra.mrb[0].mxu0 %v186
    %v281 = vpop.f32.mrb[0].mxu0
    %v282 = vadd.f32 0.0, %v281
    %v283 = vpop.f32.mrb[0].mxu0
    %v284 = vadd.f32 0.0, %v283
    %285 = vmatprep.mubr.f32.mxu0 0.0
    %286 = vmatmul.mubr.f32.gmra.mrb[0].mxu0 %v189
    %v287 = vpop.f32.mrb[0].mxu0
    %v288 = vadd.f32 0.0, %v287
    %v289 = vpop.f32.mrb[0].mxu0
    %v290 = vadd.f32 0.0, %v289
    %291 = vmatprep.mubr.f32.mxu0 0.0
    %292 = vmatmul.mubr.f32.gmra.mrb[0].mxu0 %v192
    %v293 = vpop.f32.mrb[0].mxu0
    %v294 = vadd.f32 0.0, %v293
    %v295 = vpop.f32.mrb[0].mxu0
    %v296 = vadd.f32 0.0, %v295
    %297 = vmatprep.mubr.f32.mxu0 0.0
    %298 = vmatmul.mubr.f32.gmra.mrb[0].mxu0 %v195
    %v299 = vpop.f32.mrb[0].mxu0
    %v300 = vadd.f32 0.0, %v299
    %v301 = vpop.f32.mrb[0].mxu0
    %v302 = vadd.f32 0.0, %v301
    %303 = vmatprep.mubr.f32.mxu0 0.0
    %304 = vmatmul.mubr.f32.gmra.mrb[0].mxu0 %v198
    %v305 = vpop.f32.mrb[0].mxu0
    %v306 = vadd.f32 0.0, %v305
    %v307 = vpop.f32.mrb[0].mxu0
    %v308 = vadd.f32 0.0, %v307
    %309 = vmatprep.mubr.f32.mxu0 0.0
    %310 = vmatmul.mubr.f32.gmra.mrb[0].mxu0 %v201
    %v311 = vpop.f32.mrb[0].mxu0
    %v312 = vadd.f32 0.0, %v311
    %v313 = vpop.f32.mrb[0].mxu0
    %v314 = vadd.f32 0.0, %v313
    %315 = vdwg.mxu0
    %317 = vset.pattern.permute.xlu0 16
    %318 = vperm.xlu0 %317, %v133
    %v319 = vpop.permute.xlu0 %318
    %322 = vset.pattern.permute.xlu0 16
    %323 = vperm.xlu0 %322, %v136
    %v324 = vpop.permute.xlu0 %323
    %327 = vset.pattern.permute.xlu0 16
    %328 = vperm.xlu0 %327, %v141
    %v329 = vpop.permute.xlu0 %328
    %332 = vset.pattern.permute.xlu0 16
    %333 = vperm.xlu0 %332, %v144
    %v334 = vpop.permute.xlu0 %333
    %337 = vset.pattern.permute.xlu0 16
    %338 = vperm.xlu0 %337, %v149
    %v339 = vpop.permute.xlu0 %338
    %342 = vset.pattern.permute.xlu0 16
    %343 = vperm.xlu0 %342, %v152
    %v344 = vpop.permute.xlu0 %343
    %347 = vset.pattern.permute.xlu0 16
    %348 = vperm.xlu0 %347, %v157
    %v349 = vpop.permute.xlu0 %348
    %352 = vset.pattern.permute.xlu0 16
    %353 = vperm.xlu0 %352, %v160
    %v354 = vpop.permute.xlu0 %353
    %v356 = vmul.f32 %v319, %v270
    %v357 = vmul.f32 %v324, %v276
    %v358 = vmul.f32 %v329, %v282
    %v359 = vmul.f32 %v334, %v288
    %v360 = vmul.f32 %v339, %v294
    %v361 = vmul.f32 %v344, %v300
    %v362 = vmul.f32 %v349, %v306
    %v363 = vmul.f32 %v354, %v312
    %vm364 = vcmask 138240
    %v365 = vsel %vm364, %v133, 0
    %v367 = vsel %vm364, %v136, 0
    %v369 = vsel %vm364, %v141, 0
    %v371 = vsel %vm364, %v144, 0
    %v373 = vsel %vm364, %v149, 0
    %v375 = vsel %vm364, %v152, 0
    %v377 = vsel %vm364, %v157, 0
    %v379 = vsel %vm364, %v160, 0
    %vm381 = vcmask 1040384
    %v383 = vsel %vm381, %v165, 0
    %385 = vmatprep.subr.mxu0 0.0
    %386 = vmatpush1.msra.mxu0 %v163
    %387 = vmatprep.subr.mxu0 0.0
    %388 = vmatpush1.msra.mxu0 %v164
    %389 = vmatprep.subr.mxu0 0.0
    %390 = vmatpush1.msra.mxu0 %v383
    %391 = vmatprep.subr.mxu0 0.0
    %392 = vmatpush1.msra.mxu0 0.0
    %393 = vmatprep.subr.mxu0 0.0
    %394 = vmatpush1.msra.mxu0 0.0
    %395 = vmatprep.subr.mxu0 0.0
    %396 = vmatpush1.msra.mxu0 0.0
    %397 = vmatprep.subr.mxu0 0.0
    %398 = vmatpush1.msra.mxu0 0.0
    %399 = vmatprep.subr.mxu0 0.0
    %400 = vmatpush1.msra.mxu0 0.0
    %401 = vmatprep.subr.mxu0 0.0
    %402 = vmatpush1.msra.mxu0 0.0
    %403 = vmatprep.subr.mxu0 0.0
    %404 = vmatpush1.msra.mxu0 0.0
    %405 = vmatprep.subr.mxu0 0.0
    %406 = vmatpush1.msra.mxu0 0.0
    %407 = vmatprep.subr.mxu0 0.0
    %408 = vmatpush1.msra.mxu0 0.0
    %409 = vmatprep.subr.mxu0 0.0
    %410 = vmatpush1.msra.mxu0 0.0
    %411 = vmatprep.subr.mxu0 0.0
    %412 = vmatpush1.msra.mxu0 0.0
    %413 = vmatprep.subr.mxu0 0.0
    %414 = vmatpush1.msra.mxu0 0.0
    %415 = vmatprep.subr.mxu0 0.0
    %416 = vmatpush1.msra.mxu0 0.0
    %417 = vmatprep.subr.mxu0 0.0
    %418 = vmatpush1.msra.mxu0 0.0
    %419 = vmatprep.subr.mxu0 0.0
    %420 = vmatpush1.msra.mxu0 0.0
    %421 = vmatprep.subr.mxu0 0.0
    %422 = vmatpush1.msra.mxu0 0.0
    %423 = vmatprep.subr.mxu0 0.0
    %424 = vmatpush1.msra.mxu0 0.0
    %425 = vmatprep.subr.mxu0 0.0
    %426 = vmatpush1.msra.mxu0 0.0
    %427 = vmatprep.subr.mxu0 0.0
    %428 = vmatpush1.msra.mxu0 0.0
    %429 = vmatprep.subr.mxu0 0.0
    %430 = vmatpush1.msra.mxu0 0.0
    %431 = vmatprep.subr.mxu0 0.0
    %432 = vmatpush1.msra.mxu0 0.0
    %433 = vmatprep.subr.mxu0 0.0
    %434 = vmatpush1.msra.mxu0 0.0
    %435 = vmatprep.subr.mxu0 0.0
    %436 = vmatpush1.msra.mxu0 0.0
    %437 = vmatprep.subr.mxu0 0.0
    %438 = vmatpush1.msra.mxu0 0.0
    %439 = vmatprep.subr.mxu0 0.0
    %440 = vmatpush1.msra.mxu0 0.0
    %441 = vmatprep.subr.mxu0 0.0
    %442 = vmatpush1.msra.mxu0 0.0
    %443 = vmatprep.subr.mxu0 0.0
    %444 = vmatpush1.msra.mxu0 0.0
    %445 = vmatprep.subr.mxu0 0.0
    %446 = vmatpush1.msra.mxu0 0.0
    %447 = vmatprep.subr.mxu0 0.0
    %448 = vmatpush1.msra.mxu0 0.0
    %449 = vmatprep.mubr.f32.mxu0 0.0
    %450 = vmatmul.mubr.f32.gmra.mrb[0].mxu0 %v365
    %v451 = vpop.f32.mrb[0].mxu0
    %v452 = vadd.f32 %v356, %v451
    %v453 = vpop.f32.mrb[0].mxu0
    %454 = vmatprep.mubr.f32.mxu0 0.0
    %455 = vmatmul.mubr.f32.gmra.mrb[0].mxu0 %v367
    %v456 = vpop.f32.mrb[0].mxu0
    %v457 = vadd.f32 %v357, %v456
    %v458 = vpop.f32.mrb[0].mxu0
    %459 = vmatprep.mubr.f32.mxu0 0.0
    %460 = vmatmul.mubr.f32.gmra.mrb[0].mxu0 %v369
    %v461 = vpop.f32.mrb[0].mxu0
    %v462 = vadd.f32 %v358, %v461
    %v463 = vpop.f32.mrb[0].mxu0
    %464 = vmatprep.mubr.f32.mxu0 0.0
    %465 = vmatmul.mubr.f32.gmra.mrb[0].mxu0 %v371
    %v466 = vpop.f32.mrb[0].mxu0
    %v467 = vadd.f32 %v359, %v466
    %v468 = vpop.f32.mrb[0].mxu0
    %469 = vmatprep.mubr.f32.mxu0 0.0
    %470 = vmatmul.mubr.f32.gmra.mrb[0].mxu0 %v373
    %v471 = vpop.f32.mrb[0].mxu0
    %v472 = vadd.f32 %v360, %v471
    %v473 = vpop.f32.mrb[0].mxu0
    %474 = vmatprep.mubr.f32.mxu0 0.0
    %475 = vmatmul.mubr.f32.gmra.mrb[0].mxu0 %v375
    %v476 = vpop.f32.mrb[0].mxu0
    %v477 = vadd.f32 %v361, %v476
    %v478 = vpop.f32.mrb[0].mxu0
    %479 = vmatprep.mubr.f32.mxu0 0.0
    %480 = vmatmul.mubr.f32.gmra.mrb[0].mxu0 %v377
    %v481 = vpop.f32.mrb[0].mxu0
    %v482 = vadd.f32 %v362, %v481
    %v483 = vpop.f32.mrb[0].mxu0
    %484 = vmatprep.mubr.f32.mxu0 0.0
    %485 = vmatmul.mubr.f32.gmra.mrb[0].mxu0 %v379
    %v486 = vpop.f32.mrb[0].mxu0
    %v487 = vadd.f32 %v363, %v486
    %v488 = vpop.f32.mrb[0].mxu0
    %489 = vdwg.mxu0
    %v490 = vadd.f32 %v452, %v272
    %v491 = vadd.f32 %v457, %v278
    %v492 = vadd.f32 %v462, %v284
    %v493 = vadd.f32 %v467, %v290
    %v494 = vadd.f32 %v472, %v296
    %v495 = vadd.f32 %v477, %v302
    %v496 = vadd.f32 %v482, %v308
    %v497 = vadd.f32 %v487, %v314
    %v498 = vld [vmem:[%s5] sm:$0x1]
    %v500 = vlaneseq
    %v501 = vshrl.u32 %v500, 7
    %v502 = vsub.s32 0, %v501
    %v503 = vrot.slane %v498, %v502
    %v505 = vadd.f32 %v490, %v503
    %v506 = vadd.f32 %v491, %v503
    %v507 = vadd.f32 %v492, %v503
    %v508 = vadd.f32 %v493, %v503
    %v509 = vadd.f32 %v494, %v503
    %v510 = vadd.f32 %v495, %v503
    %v511 = vadd.f32 %v496, %v503
    %v512 = vadd.f32 %v497, %v503
    %513 = vst [vmem:[#allocation2] sm:$0xff] %v505
    %514 = vst [vmem:[#allocation2 + $0x8] sm:$0xff] %v506
    %515 = vst [vmem:[#allocation2 + $0x10] sm:$0xff] %v507
    %516 = vst [vmem:[#allocation2 + $0x18] sm:$0xff] %v508
    %517 = vst [vmem:[#allocation2 + $0x20] sm:$0xff] %v509
    %518 = vst [vmem:[#allocation2 + $0x28] sm:$0xff] %v510
    %519 = vst [vmem:[#allocation2 + $0x30] sm:$0xff] %v511
    %520 = vst [vmem:[#allocation2 + $0x38] sm:$0xff] %v512
    // Predicated region
    $region26: #{tpu_custom_call.1} parent=1 // pred_check
      _
    $region27: #{tpu_custom_call.1} parent=1 // pred_check_branch
      %522 = sbr.rel (0) target = $region29
    $region28: #{tpu_custom_call.1} parent=1 // pred_region
      %s524 = ssub.s32 1024, 1024
      %525 = vsyncadd [#allocation3], %s524
      %s526 = sshll.u32 [#allocation2], 4
      %s527 = int_to_ptr.vmem [resolvable:$true] %s526
      %532 = dma.vmem_to_hbm [thread:$0]  %s527, 1024, %s6, [#allocation3], 128, 128, 8
    $region29: #{tpu_custom_call.1} parent=1 // pred_fallthru
      _
    // Predicated region
    $region30: #{tpu_custom_call.1} parent=1 // pred_check
      _
    $region31: #{tpu_custom_call.1} parent=1 // pred_check_branch
      %534 = sbr.rel (0) target = $region33
    $region32: #{tpu_custom_call.1} parent=1 // pred_region
      %535 = dma.done [#allocation3], 1024
    $region33: #{tpu_custom_call.1} parent=1 // pred_fallthru
      _
    %536 = vsyncpa [#allocation3], 1

</llo_original>
